<compile_context>
chip_gen: v5e
topology: v5e:2x2
jax: 0.10.0
libtpu: 0.0.40
codegen_flags: <defaults>
</compile_context>

<pallas_src>
import functools

import jax
import jax.numpy as jnp
from jax import lax
from jax.experimental import pallas as pl
from jax.experimental.pallas import tpu as pltpu

EPS = 1e-8
LANES = 128
CHUNK_ROWS = 256                    # inner accumulation chunk: (256,128) f32 = 128 KiB
MAX_BLOCK_BYTES = 2 * 1024 * 1024   # per-input, per-pipeline-buffer DMA block
MIN_GRID_STEPS = 4                  # keep >= ~4 steps (v7x megacore + DMA overlap)


def _rmse_log_kernel(fake_ref, real_ref, out_ref, *,
                     row_block, chunk, rows, needs_tail_mask):
    n_chunks = row_block // chunk

    if needs_tail_mask:
        # Rows of the (partial) last grid block past the real array hold
        # garbage; exclude them.  Scalar limit per block; iota hoisted out of
        # the chunk loop (JAX does not CSE broadcast_in_dim).
        valid_rows = rows - pl.program_id(0) * row_block
        row_iota = lax.broadcasted_iota(jnp.int32, (chunk, LANES), 0)

    def process_chunk(start, sum_acc, cnt_acc):
        real = real_ref[pl.ds(start, chunk), :].astype(jnp.float32)
        fake = fake_ref[pl.ds(start, chunk), :].astype(jnp.float32) + jnp.float32(EPS)

        mask = real > 0
        if needs_tail_mask:
            mask = mask & (row_iota < (valid_rows - start))

        real_safe = jnp.where(mask, real, jnp.float32(1.0))
        fake_safe = jnp.where(mask, fake, jnp.float32(1.0))
        # log(1) - log(1) == 0 where masked -> no post-hoc select needed.
        d = jnp.log(real_safe) - jnp.log(fake_safe)
        sq = d * d

        # VPU-only fold of sublane-tile groups down to one (8,128) vreg each.
        sum_acc = sum_acc + jnp.sum(sq.reshape(chunk // 8, 8, LANES), axis=0)
        cnt_acc = cnt_acc + jnp.sum(
            mask.astype(jnp.float32).reshape(chunk // 8, 8, LANES), axis=0)
        return sum_acc, cnt_acc

    zero = jnp.zeros((8, LANES), jnp.float32)
    if n_chunks == 1:
        sum_acc, cnt_acc = process_chunk(0, zero, zero)
    else:
        def body(c, carry):
            start = pl.multiple_of(c * chunk, chunk)
            return process_chunk(start, *carry)
        sum_acc, cnt_acc = lax.fori_loop(0, n_chunks, body, (zero, zero),
                                         unroll=True)

    # Single merged lane-dense output stream per step.
    out_ref[:, :LANES] = sum_acc
    out_ref[:, LANES:] = cnt_acc


def _pick_row_block(rows, itemsize):
    """Largest block <= 2 MiB/input/buffer, but >= ~MIN_GRID_STEPS grid steps."""
    max_rows = MAX_BLOCK_BYTES // (LANES * itemsize)   # 4096 for f32, 8192 for bf16
    row_block = min(max_rows, pl.cdiv(rows, MIN_GRID_STEPS))
    if row_block >= CHUNK_ROWS:
        row_block = (row_block // CHUNK_ROWS) * CHUNK_ROWS   # multiple of chunk
    else:
        row_block = pl.cdiv(row_block, 8) * 8                # multiple of 8
    return max(row_block, 8)


def rmse_log(fake, real):
    """Masked RMSE of log-space error, matching the PyTorch RMSE_log module."""
    fake_f = fake.reshape(-1)
    real_f = real.reshape(-1)
    n = fake_f.size
    itemsize = jnp.dtype(fake.dtype).itemsize

    rem = n % LANES
    if rem:
        # Rare unaligned fallback: pad <=127 elements so the flat view is a
        # free (rows, 128) bitcast.  Pad values are log-safe (fake=1) and
        # excluded by the real>0 mask (real=0).  Note jnp.pad copies the
        # array; the common NCHW case (n % 128 == 0) never takes this path.
        pad = LANES - rem
        fake_f = jnp.pad(fake_f, (0, pad), constant_values=1.0)
        real_f = jnp.pad(real_f, (0, pad), constant_values=0.0)

    rows = fake_f.size // LANES
    row_block = _pick_row_block(rows, itemsize)
    chunk = min(CHUNK_ROWS, row_block)
    num_blocks = pl.cdiv(rows, row_block)
    needs_tail_mask = (rows % row_block) != 0

    fake_2d = fake_f.reshape(rows, LANES)
    real_2d = real_f.reshape(rows, LANES)

    kernel = functools.partial(
        _rmse_log_kernel, row_block=row_block, chunk=chunk,
        rows=rows, needs_tail_mask=needs_tail_mask)

    out_bytes = num_blocks * 8 * 2 * LANES * 4
    cost = pl.CostEstimate(
        flops=8 * n,
        transcendentals=2 * n,
        bytes_accessed=2 * n * itemsize + out_bytes)

    partials = pl.pallas_call(
        kernel,
        out_shape=jax.ShapeDtypeStruct((num_blocks * 8, 2 * LANES), jnp.float32),
        grid_spec=pltpu.PrefetchScalarGridSpec(
            num_scalar_prefetch=0,
            grid=(num_blocks,),
            in_specs=[
                pl.BlockSpec((row_block, LANES), lambda i: (i, 0)),
                pl.BlockSpec((row_block, LANES), lambda i: (i, 0)),
            ],
            out_specs=pl.BlockSpec((8, 2 * LANES), lambda i: (i, 0)),
        ),
        compiler_params=pltpu.CompilerParams(
            dimension_semantics=("parallel",),      # no cross-step carry -> megacore OK
            vmem_limit_bytes=32 * 1024 * 1024,
        ),
        cost_estimate=cost,
    )(fake_2d, real_2d)

    total_sum = jnp.sum(partials[:, :LANES], dtype=jnp.float32)
    # Each count cell is an exact small integer stored in f32 (<= row_block/8);
    # cast before summing for an exact denominator.
    # TODO(synk): int32 count overflows past ~2.1e9 masked elements; enable
    # jax x64 and sum in int64 for that regime.
    total_cnt = jnp.sum(partials[:, LANES:].astype(jnp.int32))
    # n == 0 (all real <= 0) yields NaN/Inf, same as the PyTorch module.
    return jnp.sqrt(total_sum / total_cnt.astype(jnp.float32))


def _reference(fake, real):
    mask = real > 0
    fake = fake + EPS
    n = jnp.sum(mask)
    d = jnp.where(mask,
                  jnp.log(jnp.where(mask, real, 1.0))
                  - jnp.log(jnp.where(mask, fake, 1.0)),
                  0.0)
    return jnp.sqrt(jnp.sum(d * d) / n)


if __name__ == "__main__":
    key = jax.random.PRNGKey(0)
    k_fake, k_real, k_fake2, k_real2 = jax.random.split(key, 4)

    # Small depth-map-like inputs (NCHW): batch=2, channels=4, 16x16 spatial.
    shape = (2, 4, 16, 16)
    fake = jax.random.uniform(k_fake, shape, jnp.float32, minval=0.1, maxval=2.0)
    # real has some non-positive entries so the mask is exercised.
    real = jax.random.uniform(k_real, shape, jnp.float32, minval=-0.5, maxval=2.0)

    loss = jax.block_until_ready(rmse_log(fake, real))
    ref = _reference(fake, real)
    assert jnp.allclose(loss, ref, rtol=1e-4, atol=1e-6), (loss, ref)

    # Second small case whose row count is not a multiple of the block size,
    # exercising the in-kernel tail-row mask path.
    shape2 = (2, 4, 24, 24)
    fake2 = jax.random.uniform(k_fake2, shape2, jnp.float32, minval=0.1, maxval=2.0)
    real2 = jax.random.uniform(k_real2, shape2, jnp.float32, minval=-0.5, maxval=2.0)

    loss2 = jax.block_until_ready(rmse_log(fake2, real2))
    ref2 = _reference(fake2, real2)
    assert jnp.allclose(loss2, ref2, rtol=1e-4, atol=1e-6), (loss2, ref2)

    print("KERNEL_OK")
</pallas_src>

<mosaic_0001>
module attributes {stable_mosaic.version = 11 : i64} {
  func.func @_rmse_log_kernel(%arg0: i32, %arg1: memref<8x128xf32, #tpu.memory_space<vmem>>, %arg2: memref<8x128xf32, #tpu.memory_space<vmem>>, %arg3: memref<8x256xf32, #tpu.memory_space<vmem>>) attributes {dimension_semantics = [#tpu.dimension_semantics<parallel>], iteration_bounds = array<i64: 2>, scalar_prefetch = 0 : i64, scratch_operands = 0 : i64, tpu.core_type = #tpu.core_type<tc>, window_params = [{transform_indices = @transform_0, window_bounds = array<i64: 8, 128>}, {transform_indices = @transform_1, window_bounds = array<i64: 8, 128>}, {transform_indices = @transform_2, window_bounds = array<i64: 8, 256>}]} {
    %cst = arith.constant 0.000000e+00 : f32
    %0 = vector.broadcast %cst : f32 to vector<8x128xf32>
    %c0 = arith.constant 0 : index
    %c0_0 = arith.constant 0 : index
    %1 = vector.load %arg2[%c0, %c0_0] : memref<8x128xf32, #tpu.memory_space<vmem>>, vector<8x128xf32>
    %c0_1 = arith.constant 0 : index
    %c0_2 = arith.constant 0 : index
    %2 = vector.load %arg1[%c0_1, %c0_2] : memref<8x128xf32, #tpu.memory_space<vmem>>, vector<8x128xf32>
    %cst_3 = arith.constant 9.99999993E-9 : f32
    %3 = vector.broadcast %cst_3 : f32 to vector<8x128xf32>
    %4 = arith.addf %2, %3 : vector<8x128xf32>
    %cst_4 = arith.constant 0.000000e+00 : f32
    %5 = vector.broadcast %cst_4 : f32 to vector<8x128xf32>
    %6 = arith.cmpf ogt, %1, %5 : vector<8x128xf32>
    %cst_5 = arith.constant 1.000000e+00 : f32
    %7 = vector.broadcast %cst_5 : f32 to vector<8x128xf32>
    %8 = arith.select %6, %1, %7 : vector<8x128xi1>, vector<8x128xf32>
    %cst_6 = arith.constant 1.000000e+00 : f32
    %9 = vector.broadcast %cst_6 : f32 to vector<8x128xf32>
    %10 = arith.select %6, %4, %9 : vector<8x128xi1>, vector<8x128xf32>
    %11 = math.log %8 : vector<8x128xf32>
    %12 = math.log %10 : vector<8x128xf32>
    %13 = arith.subf %11, %12 : vector<8x128xf32>
    %14 = arith.mulf %13, %13 : vector<8x128xf32>
    %15 = vector.shape_cast %14 : vector<8x128xf32> to vector<1x8x128xf32>
    %cst_7 = arith.constant dense<0.000000e+00> : vector<8x128xf32>
    %16 = vector.multi_reduction <add>, %15, %cst_7 [0] : vector<1x8x128xf32> to vector<8x128xf32>
    %17 = arith.addf %0, %16 : vector<8x128xf32>
    %18 = arith.extui %6 : vector<8x128xi1> to vector<8x128xi32>
    %19 = arith.sitofp %18 : vector<8x128xi32> to vector<8x128xf32>
    %20 = vector.shape_cast %19 : vector<8x128xf32> to vector<1x8x128xf32>
    %cst_8 = arith.constant dense<0.000000e+00> : vector<8x128xf32>
    %21 = vector.multi_reduction <add>, %20, %cst_8 [0] : vector<1x8x128xf32> to vector<8x128xf32>
    %22 = arith.addf %0, %21 : vector<8x128xf32>
    %c0_9 = arith.constant 0 : index
    %c0_10 = arith.constant 0 : index
    %23 = vector.load %arg3[%c0_9, %c0_10] : memref<8x256xf32, #tpu.memory_space<vmem>>, vector<8x128xf32>
    tpu.vector_store %arg3[%c0_9, %c0_10], %17 {strides = array<i32>} : memref<8x256xf32, #tpu.memory_space<vmem>>, vector<8x128xf32>,
    %c0_11 = arith.constant 0 : index
    %c128 = arith.constant 128 : index
    %24 = vector.load %arg3[%c0_11, %c128] : memref<8x256xf32, #tpu.memory_space<vmem>>, vector<8x128xf32>
    tpu.vector_store %arg3[%c0_11, %c128], %22 {strides = array<i32>} : memref<8x256xf32, #tpu.memory_space<vmem>>, vector<8x128xf32>,
    return
  }
  func.func @transform_0(%arg0: i32) -> (i32, i32) {
    %c0_i32 = arith.constant 0 : i32
    %c0_i32_0 = arith.constant 0 : i32
    return %arg0, %c0_i32 : i32, i32
  }
  func.func @transform_1(%arg0: i32) -> (i32, i32) {
    %c0_i32 = arith.constant 0 : i32
    %c0_i32_0 = arith.constant 0 : i32
    return %arg0, %c0_i32 : i32, i32
  }
  func.func @transform_2(%arg0: i32) -> (i32, i32) {
    %c0_i32 = arith.constant 0 : i32
    %c0_i32_0 = arith.constant 0 : i32
    return %arg0, %c0_i32 : i32, i32
  }
}

</mosaic_0001>

<llo_original>
// kernel: tpu_custom_call.1
$region0: #{tpu_custom_call.1}
  #allocation0 [shape = 'u32[]', space=smem, size = 0x4, offset = 0x4, fixed_abs, tag = 'smem constant byte address 0x4 - core index']
  #allocation1 [shape = 'u32[72,128]{1,0:T(1,128)}', space=vmem, size = 0x9000, scoped, tag = 'internal scratch']
  %s0 = inlined_call_operand.hbm [shape: f32[16,128], index: 0, kind: input, shape index: {}]
  %s1 = inlined_call_operand.hbm [shape: f32[16,128], index: 1, kind: input, shape index: {}]
  %s2 = inlined_call_operand.hbm [shape: f32[16,256], index: 2, kind: output, shape index: {}]
  %s3 = sld [smem:[#allocation0]]
  $region49: #{tpu_custom_call.1} parent=0
    _
  %s5 = ssub.s32 1, %s3
  %s6 = scalar_select 0, %s5, %s3
  $region1: #{tpu_custom_call.1} parent=0
    #allocation2 [shape = 'u8[8192]{0}', space=vmem, size = 0x2000, scoped, tag = 'input window, operand 0']
    #allocation3 [shape = 's32[2]{0}', space=sflag, size = 0x8, scoped, tag = 'scoped memory for tpu_custom_call.1']
    #allocation4 [shape = 's32[2]{0}', space=sflag, size = 0x8, scoped, tag = 'scoped memory for tpu_custom_call.1']
    #allocation5 [shape = 'u8[8192]{0}', space=vmem, size = 0x2000, scoped, tag = 'input window, operand 1']
    #allocation6 [shape = 's32[2]{0}', space=sflag, size = 0x8, scoped, tag = 'scoped memory for tpu_custom_call.1']
    #allocation7 [shape = 'u8[16384]{0}', space=vmem, size = 0x4000, scoped, tag = 'output window, operand 0']
    %7 = vsyncpa [#allocation3], 0
    %s8 = scalar_lea.sflag [#allocation3], 1
    %9 = vsyncpa %s8, 0
    %10 = vsyncpa [#allocation6], 0
    %s11 = scalar_lea.sflag [#allocation6], 1
    %12 = vsyncpa %s11, 0
    %13 = vsyncpa [#allocation4], 0
    %s14 = scalar_lea.sflag [#allocation4], 1
    %15 = vsyncpa %s14, 0
    loop: start=0, step=1, limit=4
    $region2: #{tpu_custom_call.1} parent=1 // loop_pre_header
      _
    $region3: #{tpu_custom_call.1} parent=1 // loop_header
      %s17 = sphi 0, %s21
      %p18 = scmp.ge.s32.totalorder %s17, 4
      %s27 = sphi 0, %s29
      %s30 = sphi 0, %s27
      %s31 = sphi 0, %s30
      %s47 = sphi 0, %s31
      %s53 = sphi 0, %s55
      %s56 = sphi 0, %s53
      %s57 = sphi 0, %s56
      %s73 = sphi 0, %s57
      %s79 = sphi 0, %s81
      %s82 = sphi 0, %s79
      %s83 = sphi 0, %s82
      %s99 = sphi 0, %s83
    $region4: #{tpu_custom_call.1} parent=1 // loop_header_branch
      %20 = sbr.rel (%p18) target = $region8
    $region5: #{tpu_custom_call.1} parent=1 // loop_body
      %s22 = ssub.s32 %s17, 1
      %s23 = ssub.s32 %s17, 2
      %s24 = sadd.s32 %s17, 1
      %s25 = ssub.s32 %s17, %s24
      %p26 = scmp.eq.s32.totalorder %s25, 0
      %s28 = sadd.s32 %s27, 1
      %s29 = scalar_select %p26, %s27, %s28
      %p32 = pneg %p26
      %p33 = scmp.eq.s32.totalorder %s17, 1
      %p34 = por %p32, %p33
      %p35 = scmp.ne.s32.totalorder %s27, %s30
      %p36 = scmp.eq.s32.totalorder %s17, 0
      %p37 = por %p35, %p36
      %p38 = scmp.ne.s32.totalorder %s27, %s30
      %p39 = scmp.eq.s32.totalorder %s22, 1
      %p40 = por %p38, %p39
      %p41 = scmp.ne.s32.totalorder %s30, %s31
      %p42 = scmp.eq.s32.totalorder %s22, 0
      %p43 = por %p41, %p42
      %p44 = scmp.ne.s32.totalorder %s30, %s31
      %p45 = scmp.eq.s32.totalorder %s23, 1
      %p46 = por %p44, %p45
      %p48 = scmp.ne.s32.totalorder %s31, %s47
      %p49 = scmp.eq.s32.totalorder %s23, 0
      %p50 = por %p48, %p49
      %s51 = ssub.s32 %s17, %s24
      %p52 = scmp.eq.s32.totalorder %s51, 0
      %s54 = sadd.s32 %s53, 1
      %s55 = scalar_select %p52, %s53, %s54
      %p58 = pneg %p52
      %p59 = scmp.eq.s32.totalorder %s17, 1
      %p60 = por %p58, %p59
      %p61 = scmp.ne.s32.totalorder %s53, %s56
      %p62 = scmp.eq.s32.totalorder %s17, 0
      %p63 = por %p61, %p62
      %p64 = scmp.ne.s32.totalorder %s53, %s56
      %p65 = scmp.eq.s32.totalorder %s22, 1
      %p66 = por %p64, %p65
      %p67 = scmp.ne.s32.totalorder %s56, %s57
      %p68 = scmp.eq.s32.totalorder %s22, 0
      %p69 = por %p67, %p68
      %p70 = scmp.ne.s32.totalorder %s56, %s57
      %p71 = scmp.eq.s32.totalorder %s23, 1
      %p72 = por %p70, %p71
      %p74 = scmp.ne.s32.totalorder %s57, %s73
      %p75 = scmp.eq.s32.totalorder %s23, 0
      %p76 = por %p74, %p75
      %s77 = ssub.s32 %s17, %s24
      %p78 = scmp.eq.s32.totalorder %s77, 0
      %s80 = sadd.s32 %s79, 1
      %s81 = scalar_select %p78, %s79, %s80
      %p84 = pneg %p78
      %p85 = scmp.eq.s32.totalorder %s17, 1
      %p86 = por %p84, %p85
      %p87 = scmp.ne.s32.totalorder %s79, %s82
      %p88 = scmp.eq.s32.totalorder %s17, 0
      %p89 = por %p87, %p88
      %p90 = scmp.ne.s32.totalorder %s79, %s82
      %p91 = scmp.eq.s32.totalorder %s22, 1
      %p92 = por %p90, %p91
      %p93 = scmp.ne.s32.totalorder %s82, %s83
      %p94 = scmp.eq.s32.totalorder %s22, 0
      %p95 = por %p93, %p94
      %p96 = scmp.ne.s32.totalorder %s82, %s83
      %p97 = scmp.eq.s32.totalorder %s23, 1
      %p98 = por %p96, %p97
      %p100 = scmp.ne.s32.totalorder %s83, %s99
      %p101 = scmp.eq.s32.totalorder %s23, 0
      %p102 = por %p100, %p101
      %p103 = scmp.le.s32.totalorder 1, %s17
      %p104 = scmp.lt.s32.totalorder %s17, 3
      %p105 = pnand %p103, %p104
      %p106 = pneg %p105
      // Predicated region
      $region9: #{tpu_custom_call.1} parent=5 // pred_check
        _
      $region10: #{tpu_custom_call.1} parent=5 // pred_check_branch
        %108 = sbr.rel (%p105) target = $region12
      $region11: #{tpu_custom_call.1} parent=5 // pred_region
        %s109 = ssub.s32 %s17, 1
      $region12: #{tpu_custom_call.1} parent=5 // pred_fallthru
        _
      %p110 = scmp.lt.s32.totalorder %s17, 2
      // Predicated region
      $region13: #{tpu_custom_call.1} parent=5 // pred_check
        %p111 = pneg %p110
      $region14: #{tpu_custom_call.1} parent=5 // pred_check_branch
        %113 = sbr.rel (%p111) target = $region16
      $region15: #{tpu_custom_call.1} parent=5 // pred_region
        // Predicated region
        $region17: #{tpu_custom_call.1} parent=15 // pred_check
          %p114 = pneg %p37
        $region18: #{tpu_custom_call.1} parent=15 // pred_check_branch
          %116 = sbr.rel (%p114) target = $region20
        $region19: #{tpu_custom_call.1} parent=15 // pred_region
          %s117 = sand.u32 %s27, 1
          %s118 = scalar_lea.sflag [#allocation3], %s117
          %s119 = sand.u32 %s27, 1
          %s120 = smul.addr %s119, 8
          %s121 = scalar_lea.vmem [#allocation2], %s120
          %123 = vsyncadd %s118, 0
          %s124 = smul.addr %s17, 8
          %s125 = scalar_lea.hbm %s0, %s124
          %s127 = sshll.u32 %s125, 4
          %s128 = int_to_ptr.hbm [resolvable:$true] %s127
          %s129 = sshll.u32 %s121, 4
          %s130 = int_to_ptr.vmem [resolvable:$true] %s129
          %132 = dma.hbm_to_vmem [thread:$0]  %s128, 128, %s130, %s118
        $region20: #{tpu_custom_call.1} parent=15 // pred_fallthru
          _
        // Predicated region
        $region21: #{tpu_custom_call.1} parent=15 // pred_check
          %p133 = pneg %p63
        $region22: #{tpu_custom_call.1} parent=15 // pred_check_branch
          %135 = sbr.rel (%p133) target = $region24
        $region23: #{tpu_custom_call.1} parent=15 // pred_region
          %s136 = sand.u32 %s53, 1
          %s137 = scalar_lea.sflag [#allocation6], %s136
          %s138 = sand.u32 %s53, 1
          %s139 = smul.addr %s138, 8
          %s140 = scalar_lea.vmem [#allocation5], %s139
          %142 = vsyncadd %s137, 0
          %s143 = smul.addr %s17, 8
          %s144 = scalar_lea.hbm %s1, %s143
          %s146 = sshll.u32 %s144, 4
          %s147 = int_to_ptr.hbm [resolvable:$true] %s146
          %s148 = sshll.u32 %s140, 4
          %s149 = int_to_ptr.vmem [resolvable:$true] %s148
          %151 = dma.hbm_to_vmem [thread:$0]  %s147, 128, %s149, %s137
        $region24: #{tpu_custom_call.1} parent=15 // pred_fallthru
          _
      $region16: #{tpu_custom_call.1} parent=5 // pred_fallthru
        _
      %p152 = scmp.le.s32.totalorder 1, %s17
      %p153 = scmp.lt.s32.totalorder %s17, 3
      %p154 = pnand %p152, %p153
      %p155 = pneg %p154
      // Predicated region
      $region25: #{tpu_custom_call.1} parent=5 // pred_check
        _
      $region26: #{tpu_custom_call.1} parent=5 // pred_check_branch
        %157 = sbr.rel (%p154) target = $region28
      $region27: #{tpu_custom_call.1} parent=5 // pred_region
        %s158 = ssub.s32 %s17, 1
        %s159 = sand.u32 %s30, 1
        %s160 = scalar_lea.sflag [#allocation3], %s159
        %s161 = sand.u32 %s30, 1
        %s162 = smul.addr %s161, 8
        %s163 = scalar_lea.vmem [#allocation2], %s162
        // Predicated region
        $region29: #{tpu_custom_call.1} parent=27 // pred_check
          %p164 = pneg %p43
        $region30: #{tpu_custom_call.1} parent=27 // pred_check_branch
          %166 = sbr.rel (%p164) target = $region32
        $region31: #{tpu_custom_call.1} parent=27 // pred_region
          %168 = dma.done %s160, 128
        $region32: #{tpu_custom_call.1} parent=27 // pred_fallthru
          _
        %s169 = sand.u32 %s56, 1
        %s170 = scalar_lea.sflag [#allocation6], %s169
        %s171 = sand.u32 %s56, 1
        %s172 = smul.addr %s171, 8
        %s173 = scalar_lea.vmem [#allocation5], %s172
        // Predicated region
        $region33: #{tpu_custom_call.1} parent=27 // pred_check
          %p174 = pneg %p69
        $region34: #{tpu_custom_call.1} parent=27 // pred_check_branch
          %176 = sbr.rel (%p174) target = $region36
        $region35: #{tpu_custom_call.1} parent=27 // pred_region
          %178 = dma.done %s170, 128
        $region36: #{tpu_custom_call.1} parent=27 // pred_fallthru
          _
        %s179 = sand.u32 %s30, 1
        %s180 = scalar_lea.sflag [#allocation3], %s179
        %s181 = sand.u32 %s30, 1
        %s182 = smul.addr %s181, 8
        %s183 = scalar_lea.vmem [#allocation2], %s182
        %p184 = pneg %p43
        %p185 = pneg %p40
        %s186 = sand.u32 %s56, 1
        %s187 = scalar_lea.sflag [#allocation6], %s186
        %s188 = sand.u32 %s56, 1
        %s189 = smul.addr %s188, 8
        %s190 = scalar_lea.vmem [#allocation5], %s189
        %p191 = pneg %p69
        %p192 = pneg %p66
        %p193 = pneg %p95
        %p194 = pneg %p92
        %s195 = sand.u32 %s82, 1
        %s196 = scalar_lea.sflag [#allocation4], %s195
        %s197 = sand.u32 %s82, 1
        %s198 = smul.addr %s197, 16
        %s199 = scalar_lea.vmem [#allocation7], %s198
        %v200 = vld [vmem:[%s173] sm:$0xff]
        %v201 = vld [vmem:[%s163] sm:$0xff]
        %v202 = vadd.f32 %v201, 1e-08
        %vm203 = vcmp.gt.f32.partialorder %v200, 0.0
        %v204 = vsel %vm203, %v200, 1.0
        %v205 = vsel %vm203, %v202, 1.0
        %v206 = vlog2.pop %v204
        %v207 = vmul.f32 %v206, 0.6931472
        %v208 = vlog2.pop %v205
        %v209 = vmul.f32 %v208, 0.6931472
        %v210 = vsub.f32 %v207, %v209
        %v211 = vmul.f32 %v210, %v210
        %v212 = vadd.f32 %v211, 0.0
        %v213 = vadd.f32 %v212, 0.0
        %v214 = vsel %vm203, 1, 0
        %v215 = vcvt.s32.f32 %v214
        %v216 = vadd.f32 %v215, 0.0
        %v217 = vadd.f32 %v216, 0.0
        %218 = vst [vmem:[%s199] sm:$0xff] %v213
        %219 = vst [vmem:[%s199 + $0x8] sm:$0xff] %v217
        %s220 = sand.u32 %s82, 1
        %s221 = scalar_lea.sflag [#allocation4], %s220
        %s222 = sand.u32 %s82, 1
        %s223 = smul.addr %s222, 16
        %s224 = scalar_lea.vmem [#allocation7], %s223
        // Predicated region
        $region37: #{tpu_custom_call.1} parent=27 // pred_check
          %p225 = pneg %p92
        $region38: #{tpu_custom_call.1} parent=27 // pred_check_branch
          %227 = sbr.rel (%p225) target = $region40
        $region39: #{tpu_custom_call.1} parent=27 // pred_region
          %229 = vsyncadd %s221, 0
          %s230 = smul.addr %s22, 2
          %s231 = smul.addr %s230, 8
          %s232 = scalar_lea.hbm %s2, %s231
          %s234 = sshll.u32 %s224, 4
          %s235 = int_to_ptr.vmem [resolvable:$true] %s234
          %s236 = sshll.u32 %s232, 4
          %s237 = int_to_ptr.hbm [resolvable:$true] %s236
          %239 = dma.vmem_to_hbm [thread:$0]  %s235, 256, %s237, %s221
        $region40: #{tpu_custom_call.1} parent=27 // pred_fallthru
          _
      $region28: #{tpu_custom_call.1} parent=5 // pred_fallthru
        _
      %p240 = scmp.le.s32.totalorder 2, %s17
      // Predicated region
      $region41: #{tpu_custom_call.1} parent=5 // pred_check
        %p241 = pneg %p240
      $region42: #{tpu_custom_call.1} parent=5 // pred_check_branch
        %243 = sbr.rel (%p241) target = $region44
      $region43: #{tpu_custom_call.1} parent=5 // pred_region
        %s244 = ssub.s32 %s17, 2
        // Predicated region
        $region45: #{tpu_custom_call.1} parent=43 // pred_check
          %p245 = pneg %p98
        $region46: #{tpu_custom_call.1} parent=43 // pred_check_branch
          %247 = sbr.rel (%p245) target = $region48
        $region47: #{tpu_custom_call.1} parent=43 // pred_region
          %s248 = sand.u32 %s83, 1
          %s249 = scalar_lea.sflag [#allocation4], %s248
          %s250 = sand.u32 %s83, 1
          %s251 = smul.addr %s250, 16
          %s252 = scalar_lea.vmem [#allocation7], %s251
          %254 = dma.done %s249, 256
        $region48: #{tpu_custom_call.1} parent=43 // pred_fallthru
          _
      $region44: #{tpu_custom_call.1} parent=5 // pred_fallthru
        _
    $region6: #{tpu_custom_call.1} parent=1 // loop_footer
      %s21 = sadd.s32 1, %s17
    $region7: #{tpu_custom_call.1} parent=1 // loop_footer_branch
      %16 = sbr.rel target = $region3
    $region8: #{tpu_custom_call.1} parent=1 // loop_exit
      _
    %255 = vsyncpa [#allocation3], 1
    %s256 = scalar_lea.sflag [#allocation3], 1
    %257 = vsyncpa %s256, 1
    %258 = vsyncpa [#allocation6], 1
    %s259 = scalar_lea.sflag [#allocation6], 1
    %260 = vsyncpa %s259, 1
    %261 = vsyncpa [#allocation4], 1
    %s262 = scalar_lea.sflag [#allocation4], 1
    %263 = vsyncpa %s262, 1

</llo_original>
